<compile_context>
chip_gen: v5e
topology: v5e:2x2
jax: 0.10.0
libtpu: 0.0.40
codegen_flags: <defaults>
</compile_context>

<pallas_src>
import functools

import jax
import jax.numpy as jnp
from jax.experimental import pallas as pl
from jax.experimental.pallas import tpu as pltpu


_VMEM_LIMIT_BYTES = 48 * 1024 * 1024  # <= 48 MiB: safe on v7x, plenty on v5e/v6e


def _round_up(x, m):
    return (x + m - 1) // m * m


def _focal_power(one_minus_pt, gamma):
    """(1 - p_t) ** gamma; small integer gamma uses VALU multiplies only."""
    g = float(gamma)
    if g == int(g) and 0 <= int(g) <= 8:
        gi = int(g)
        if gi == 0:
            return jnp.ones_like(one_minus_pt)
        acc = one_minus_pt
        for _ in range(gi - 1):
            acc = acc * one_minus_pt
        return acc
    return one_minus_pt ** g  # non-integer gamma: transcendental pow path


def _per_row_focal(x_ref, tgt_ref, alpha_ref, gamma, has_alpha):
    """Per-row focal loss for one (TILE_N, C) tile. Returns (TILE_N, 1) f32.

    Cross-lane work per tile: 1 XLU reduction (row max); the three row-sums
    (sum-exp, target-logit gather, alpha gather) run on the idle MXU as
    (TILE_N, C) @ (C, 1) matmuls.
    """
    x = x_ref[...].astype(jnp.float32)            # (T, C), upcast in VMEM
    tgt = tgt_ref[...]                            # (T, 1) int32
    t, c = x.shape

    m = jnp.max(x, axis=1, keepdims=True)                       # (T, 1)  XLU
    shifted = x - m                                             # (T, C)
    exp_shifted = jnp.exp(shifted)                              # (T, C)  EUP

    ones_col = jnp.ones((c, 1), jnp.float32)
    sum_exp = jnp.dot(exp_shifted, ones_col,
                      preferred_element_type=jnp.float32)       # (T, 1)  MXU

    class_idx = jax.lax.broadcasted_iota(jnp.int32, (t, c), 1)  # (T, C)
    mask = class_idx == tgt                                     # (T, C) bool
    sel_shifted = jnp.where(mask, shifted, 0.0)                 # masked select
    x_t = jnp.dot(sel_shifted, ones_col,
                  preferred_element_type=jnp.float32)           # (T, 1)  MXU

    # Everything below is O(TILE_N).
    logp_t = x_t - jnp.log(sum_exp)                             # (T, 1)
    p_t = jnp.exp(logp_t)
    one_minus = jnp.maximum(1.0 - p_t, 0.0)   # guard: exp rounding can give p_t>1
    loss = -(_focal_power(one_minus, gamma) * logp_t)           # (T, 1)

    if has_alpha:
        one_hot = mask.astype(jnp.float32)                      # MXU dot operand
        alpha_col = alpha_ref[...].astype(jnp.float32)          # (C, 1)
        alpha_t = jnp.dot(one_hot, alpha_col,
                          preferred_element_type=jnp.float32)   # (T, 1)  MXU
        loss = alpha_t * loss
    return loss


def _focal_none_kernel(x_ref, tgt_ref, alpha_ref, out_ref, *, gamma, has_alpha):
    out_ref[...] = _per_row_focal(x_ref, tgt_ref, alpha_ref, gamma, has_alpha)


def _focal_reduce_kernel(x_ref, tgt_ref, alpha_ref, out_ref, acc_ref, *,
                         gamma, has_alpha, n_rows, tile_n):
    p = pl.program_id(0)            # megacore-parallel partial-sum axis
    i = pl.program_id(1)            # serial reduction axis
    steps = pl.num_programs(1)

    @pl.when(i == 0)
    def _():
        acc_ref[...] = jnp.zeros_like(acc_ref)

    per_row = _per_row_focal(x_ref, tgt_ref, alpha_ref, gamma, has_alpha)

    # Mask rows past the true batch size (padded last tile / clamped OOB tile)
    # BEFORE any reduction.
    row = (p * steps + i) * tile_n + jax.lax.broadcasted_iota(
        jnp.int32, (tile_n, 1), 0)
    per_row = jnp.where(row < n_rows, per_row, 0.0)

    acc_ref[...] = acc_ref[...] + jnp.sum(per_row)

    @pl.when(i == steps - 1)
    def _():
        out_ref[...] = acc_ref[...].reshape(out_ref.shape)


def _pick_tile_n(n, c, in_itemsize):
    # Per-row working set: double-buffered input tile (original dtype) plus
    # ~8 full-width f32 temporaries live in the body (upcast, shifted, exp,
    # iota, mask/selects, one-hot).  Sized against the scoped-VMEM limit with
    # headroom; no artificial row cap — small C gets multi-thousand-row tiles
    # so the per-grid-step overhead amortizes.
    bytes_per_row = 2 * c * in_itemsize + 8 * c * 4
    budget = (2 * _VMEM_LIMIT_BYTES) // 3
    t = budget // max(1, bytes_per_row)
    t = min(t, _round_up(n, 32))            # at most one (padded) tile of rows
    t = (t // 32) * 32 if t >= 32 else 8    # sublane-safe for f32/bf16/int8
    return max(8, int(t))


def focal_loss(inputs, targets, alpha=None, gamma=2.0, reduction="mean",
               tile_n=None):
    """Pallas FocalLoss forward.

    inputs:  (N, C) float logits (any float dtype; upcast to f32 in-kernel)
    targets: (N,)   int class indices
    alpha:   optional (C,) float class weights
    """
    n, c = inputs.shape
    tgt = targets.astype(jnp.int32).reshape(n, 1)
    has_alpha = alpha is not None
    if has_alpha:
        alpha_col = jnp.asarray(alpha, jnp.float32).reshape(c, 1)
    else:
        alpha_col = jnp.ones((c, 1), jnp.float32)   # passed but unused

    if tile_n is None:
        tile_n = _pick_tile_n(n, c, inputs.dtype.itemsize)
    tile_n = max(8, (int(tile_n) // 8) * 8)
    num_tiles = pl.cdiv(n, tile_n)

    if reduction in ("mean", "sum"):
        num_cores = 2                           # megacore partials (v7x); plain
        steps = pl.cdiv(num_tiles, num_cores)   # nested loop on v5e/v6e

        def blk(p_, i):
            # Clamp fully-out-of-range tiles (odd num_tiles); their rows are
            # masked to zero inside the kernel.
            return jnp.minimum(p_ * steps + i, num_tiles - 1)

        kernel = functools.partial(
            _focal_reduce_kernel, gamma=float(gamma), has_alpha=has_alpha,
            n_rows=n, tile_n=tile_n)
        partials = pl.pallas_call(
            kernel,
            out_shape=jax.ShapeDtypeStruct((num_cores, 1, 1), jnp.float32),
            grid_spec=pltpu.PrefetchScalarGridSpec(
                num_scalar_prefetch=0,
                grid=(num_cores, steps),
                in_specs=[
                    pl.BlockSpec((tile_n, c), lambda p_, i: (blk(p_, i), 0)),
                    pl.BlockSpec((tile_n, 1), lambda p_, i: (blk(p_, i), 0)),
                    pl.BlockSpec((c, 1), lambda p_, i: (0, 0)),
                ],
                out_specs=pl.BlockSpec((1, 1, 1), lambda p_, i: (p_, 0, 0)),
                scratch_shapes=[pltpu.VMEM((1, 1), jnp.float32)],
            ),
            compiler_params=pltpu.CompilerParams(
                dimension_semantics=("parallel", "arbitrary"),
                vmem_limit_bytes=_VMEM_LIMIT_BYTES),
        )(inputs, tgt, alpha_col)
        total = jnp.sum(partials)
        if reduction == "mean":
            return total / jnp.float32(n)
        return total

    # reduction == 'none'
    kernel = functools.partial(_focal_none_kernel, gamma=float(gamma),
                               has_alpha=has_alpha)
    out = pl.pallas_call(
        kernel,
        out_shape=jax.ShapeDtypeStruct((n, 1), jnp.float32),
        grid_spec=pltpu.PrefetchScalarGridSpec(
            num_scalar_prefetch=0,
            grid=(num_tiles,),
            in_specs=[
                pl.BlockSpec((tile_n, c), lambda i: (i, 0)),
                pl.BlockSpec((tile_n, 1), lambda i: (i, 0)),
                pl.BlockSpec((c, 1), lambda i: (0, 0)),
            ],
            out_specs=pl.BlockSpec((tile_n, 1), lambda i: (i, 0)),
        ),
        compiler_params=pltpu.CompilerParams(
            dimension_semantics=("parallel",),
            vmem_limit_bytes=_VMEM_LIMIT_BYTES),
    )(inputs, tgt, alpha_col)
    return out[:, 0]


def _focal_loss_ref(inputs, targets, alpha=None, gamma=2.0, reduction="mean"):
    log_probs = jax.nn.log_softmax(inputs, axis=1)
    probs = jnp.exp(log_probs)
    one_hot = jax.nn.one_hot(targets, inputs.shape[1], dtype=jnp.float32)
    loss = -((1.0 - probs) ** gamma) * log_probs
    if alpha is not None:
        loss = loss * alpha[targets][:, None]
    loss = jnp.sum(loss * one_hot, axis=1)
    if reduction == "mean":
        return jnp.mean(loss)
    if reduction == "sum":
        return jnp.sum(loss)
    return loss


if __name__ == "__main__":
    key = jax.random.PRNGKey(0)
    k1, k2, k3 = jax.random.split(key, 3)

    # Case 1: default config (alpha=None, gamma=2.0, reduction='mean').
    N, C = 8, 32
    logits = jax.random.normal(k1, (N, C), jnp.float32)
    targets = jax.random.randint(k2, (N,), 0, C, jnp.int32)
    alpha = jax.random.uniform(k3, (C,), jnp.float32, 0.25, 1.0)

    out_mean = focal_loss(logits, targets)
    jax.block_until_ready(out_mean)
    ref_mean = _focal_loss_ref(logits, targets)
    assert jnp.allclose(out_mean, ref_mean, rtol=1e-4, atol=1e-5)

    # Case 2: alpha weights + 'none' reduction.
    out_none = focal_loss(logits, targets, alpha=alpha, gamma=2.0,
                          reduction="none")
    jax.block_until_ready(out_none)
    ref_none = _focal_loss_ref(logits, targets, alpha=alpha, gamma=2.0,
                               reduction="none")
    assert jnp.allclose(out_none, ref_none, rtol=1e-4, atol=1e-5)

    # Case 3: 2x2 reduce grid (padded last tile + clamped OOB tile), 'sum',
    # non-integer gamma.
    N2, C2 = 300, 64
    logits2 = jax.random.normal(k1, (N2, C2), jnp.float32)
    targets2 = jax.random.randint(k2, (N2,), 0, C2, jnp.int32)
    out_sum = focal_loss(logits2, targets2, gamma=1.5, reduction="sum",
                         tile_n=128)
    jax.block_until_ready(out_sum)
    ref_sum = _focal_loss_ref(logits2, targets2, gamma=1.5, reduction="sum")
    assert jnp.allclose(out_sum, ref_sum, rtol=1e-4, atol=1e-4)

    # Case 4: multi-tile 'none' with a partial last output block + alpha.
    alpha2 = jax.random.uniform(k3, (C2,), jnp.float32, 0.25, 1.0)
    out_none2 = focal_loss(logits2, targets2, alpha=alpha2, reduction="none",
                           tile_n=128)
    jax.block_until_ready(out_none2)
    ref_none2 = _focal_loss_ref(logits2, targets2, alpha=alpha2,
                                reduction="none")
    assert jnp.allclose(out_none2, ref_none2, rtol=1e-4, atol=1e-5)

    # Case 5: bf16 logits enter the kernel uncast (upcast happens in VMEM).
    logits_bf16 = logits.astype(jnp.bfloat16)
    out_bf = focal_loss(logits_bf16, targets, alpha=alpha, reduction="mean")
    jax.block_until_ready(out_bf)
    ref_bf = _focal_loss_ref(logits_bf16.astype(jnp.float32), targets,
                             alpha=alpha)
    assert jnp.allclose(out_bf, ref_bf, rtol=1e-4, atol=1e-4)

    print("KERNEL_OK")
</pallas_src>

<mosaic_0001>
module attributes {stable_mosaic.version = 11 : i64} {
  func.func @_focal_reduce_kernel(%arg0: i32, %arg1: i32, %arg2: memref<32x32xf32, #tpu.memory_space<vmem>>, %arg3: memref<32x1xi32, #tpu.memory_space<vmem>>, %arg4: memref<32x1xf32, #tpu.memory_space<vmem>>, %arg5: memref<1x1x1xf32, #tpu.memory_space<vmem>>, %arg6: memref<1x1xf32, #tpu.memory_space<vmem>>) attributes {dimension_semantics = [#tpu.dimension_semantics<parallel>, #tpu.dimension_semantics<arbitrary>], iteration_bounds = array<i64: 2, 1>, scalar_prefetch = 0 : i64, scratch_operands = 1 : i64, tpu.core_type = #tpu.core_type<tc>, window_params = [{transform_indices = @transform_0, window_bounds = array<i64: 32, 32>}, {transform_indices = @transform_1, window_bounds = array<i64: 32, 1>}, {pipeline_mode = #tpu.pipeline_mode<synchronous>, transform_indices = @transform_2, window_bounds = array<i64: 32, 1>}, {transform_indices = @transform_3, window_bounds = array<i64: 1, 1, 1>}]} {
    %c0_i32 = arith.constant 0 : i32
    %0 = arith.cmpi eq, %arg1, %c0_i32 : i32
    %1 = arith.extui %0 : i1 to i32
    %c0_i32_0 = arith.constant 0 : i32
    %2 = arith.cmpi ne, %1, %c0_i32_0 : i32
    scf.if %2 {
      %cst_19 = arith.constant 0.000000e+00 : f32
      %50 = vector.broadcast %cst_19 : f32 to vector<1x1xf32>
      %c0_20 = arith.constant 0 : index
      %c0_21 = arith.constant 0 : index
      %51 = vector.load %arg6[%c0_20, %c0_21] : memref<1x1xf32, #tpu.memory_space<vmem>>, vector<1x1xf32>
      tpu.vector_store %arg6[%c0_20, %c0_21], %50 {strides = array<i32>} : memref<1x1xf32, #tpu.memory_space<vmem>>, vector<1x1xf32>,
    } else {
    }
    %c0 = arith.constant 0 : index
    %c0_1 = arith.constant 0 : index
    %3 = vector.load %arg2[%c0, %c0_1] : memref<32x32xf32, #tpu.memory_space<vmem>>, vector<32x32xf32>
    %c0_2 = arith.constant 0 : index
    %c0_3 = arith.constant 0 : index
    %4 = vector.load %arg3[%c0_2, %c0_3] : memref<32x1xi32, #tpu.memory_space<vmem>>, vector<32x1xi32>
    %cst = arith.constant dense<0xFF800000> : vector<32xf32>
    %5 = vector.multi_reduction <maximumf>, %3, %cst [1] : vector<32x32xf32> to vector<32xf32>
    %6 = vector.shape_cast %5 : vector<32xf32> to vector<32x1xf32>
    %7 = vector.broadcast %6 : vector<32x1xf32> to vector<32x32xf32>
    %8 = arith.subf %3, %7 : vector<32x32xf32>
    %9 = math.exp %8 : vector<32x32xf32>
    %cst_4 = arith.constant 1.000000e+00 : f32
    %10 = vector.broadcast %cst_4 : f32 to vector<32x1xf32>
    %cst_5 = arith.constant dense<0.000000e+00> : vector<32x1xf32>
    %11 = tpu.matmul %9, %10, %cst_5 {dimension_numbers = #tpu.dot_dimension_numbers<[1], [0], [0], [1], [0, 0, 1, 1], [], []>} : vector<32x32xf32>, vector<32x1xf32>, vector<32x1xf32> -> vector<32x1xf32>
    %12 = tpu.iota {dimensions = array<i32: 1>} : vector<32x32xi32>
    %13 = vector.broadcast %4 : vector<32x1xi32> to vector<32x32xi32>
    %14 = arith.cmpi eq, %12, %13 : vector<32x32xi32>
    %cst_6 = arith.constant 0.000000e+00 : f32
    %15 = vector.broadcast %cst_6 : f32 to vector<32x32xf32>
    %16 = arith.select %14, %8, %15 : vector<32x32xi1>, vector<32x32xf32>
    %cst_7 = arith.constant dense<0.000000e+00> : vector<32x1xf32>
    %17 = tpu.matmul %16, %10, %cst_7 {dimension_numbers = #tpu.dot_dimension_numbers<[1], [0], [0], [1], [0, 0, 1, 1], [], []>} : vector<32x32xf32>, vector<32x1xf32>, vector<32x1xf32> -> vector<32x1xf32>
    %18 = math.log %11 : vector<32x1xf32>
    %19 = arith.subf %17, %18 : vector<32x1xf32>
    %20 = math.exp %19 : vector<32x1xf32>
    %cst_8 = arith.constant 1.000000e+00 : f32
    %21 = vector.broadcast %cst_8 : f32 to vector<32x1xf32>
    %22 = arith.subf %21, %20 : vector<32x1xf32>
    %cst_9 = arith.constant 0.000000e+00 : f32
    %23 = vector.broadcast %cst_9 : f32 to vector<32x1xf32>
    %24 = arith.maximumf %22, %23 : vector<32x1xf32>
    %25 = arith.mulf %24, %24 : vector<32x1xf32>
    %26 = arith.mulf %25, %19 : vector<32x1xf32>
    %cst_10 = arith.constant 0.000000e+00 : f32
    %27 = vector.broadcast %cst_10 : f32 to vector<32x1xf32>
    %28 = arith.subf %27, %26 : vector<32x1xf32>
    %c1_i32 = arith.constant 1 : i32
    %29 = arith.muli %arg0, %c1_i32 : i32
    %30 = arith.addi %29, %arg1 : i32
    %c32_i32 = arith.constant 32 : i32
    %31 = arith.muli %30, %c32_i32 : i32
    %32 = tpu.iota {dimensions = array<i32: 0>} : vector<32x1xi32>
    %33 = vector.broadcast %31 : i32 to vector<32x1xi32>
    %34 = arith.addi %33, %32 : vector<32x1xi32>
    %c8_i32 = arith.constant 8 : i32
    %35 = vector.broadcast %c8_i32 : i32 to vector<32x1xi32>
    %36 = arith.cmpi slt, %34, %35 : vector<32x1xi32>
    %cst_11 = arith.constant 0.000000e+00 : f32
    %37 = vector.broadcast %cst_11 : f32 to vector<32x1xf32>
    %38 = arith.select %36, %28, %37 : vector<32x1xi1>, vector<32x1xf32>
    %c0_12 = arith.constant 0 : index
    %c0_13 = arith.constant 0 : index
    %39 = vector.load %arg6[%c0_12, %c0_13] : memref<1x1xf32, #tpu.memory_space<vmem>>, vector<1x1xf32>
    %40 = vector.shape_cast %38 : vector<32x1xf32> to vector<1x32x1xf32>
    %cst_14 = arith.constant dense<0.000000e+00> : vector<1xf32>
    %41 = vector.multi_reduction <add>, %40, %cst_14 [1, 2] : vector<1x32x1xf32> to vector<1xf32>
    %42 = vector.shape_cast %41 : vector<1xf32> to vector<1x1x1xf32>
    %43 = vector.extract %42[0, 0, 0] : f32 from vector<1x1x1xf32>
    %44 = vector.broadcast %43 : f32 to vector<1x1xf32>
    %45 = arith.addf %39, %44 : vector<1x1xf32>
    %c0_15 = arith.constant 0 : index
    %c0_16 = arith.constant 0 : index
    %46 = vector.load %arg6[%c0_15, %c0_16] : memref<1x1xf32, #tpu.memory_space<vmem>>, vector<1x1xf32>
    tpu.vector_store %arg6[%c0_15, %c0_16], %45 {strides = array<i32>} : memref<1x1xf32, #tpu.memory_space<vmem>>, vector<1x1xf32>,
    %c0_i32_17 = arith.constant 0 : i32
    %47 = arith.cmpi eq, %arg1, %c0_i32_17 : i32
    %48 = arith.extui %47 : i1 to i32
    %c0_i32_18 = arith.constant 0 : i32
    %49 = arith.cmpi ne, %48, %c0_i32_18 : i32
    scf.if %49 {
      %c0_19 = arith.constant 0 : index
      %c0_20 = arith.constant 0 : index
      %50 = vector.load %arg6[%c0_19, %c0_20] : memref<1x1xf32, #tpu.memory_space<vmem>>, vector<1x1xf32>
      %51 = vector.shape_cast %50 : vector<1x1xf32> to vector<1x1x1xf32>
      %c0_21 = arith.constant 0 : index
      %c0_22 = arith.constant 0 : index
      %c0_23 = arith.constant 0 : index
      %52 = vector.load %arg5[%c0_21, %c0_22, %c0_23] : memref<1x1x1xf32, #tpu.memory_space<vmem>>, vector<1x1x1xf32>
      tpu.vector_store %arg5[%c0_21, %c0_22, %c0_23], %51 {strides = array<i32>} : memref<1x1x1xf32, #tpu.memory_space<vmem>>, vector<1x1x1xf32>,
    } else {
    }
    return
  }
  func.func @transform_0(%arg0: i32, %arg1: i32) -> (i32, i32) {
    %c1_i32 = arith.constant 1 : i32
    %0 = arith.muli %arg0, %c1_i32 : i32
    %1 = arith.addi %0, %arg1 : i32
    %c0_i32 = arith.constant 0 : i32
    %2 = arith.minsi %1, %c0_i32 : i32
    %c0_i32_0 = arith.constant 0 : i32
    %c0_i32_1 = arith.constant 0 : i32
    return %2, %c0_i32_0 : i32, i32
  }
  func.func @transform_1(%arg0: i32, %arg1: i32) -> (i32, i32) {
    %c1_i32 = arith.constant 1 : i32
    %0 = arith.muli %arg0, %c1_i32 : i32
    %1 = arith.addi %0, %arg1 : i32
    %c0_i32 = arith.constant 0 : i32
    %2 = arith.minsi %1, %c0_i32 : i32
    %c0_i32_0 = arith.constant 0 : i32
    %c0_i32_1 = arith.constant 0 : i32
    return %2, %c0_i32_0 : i32, i32
  }
  func.func @transform_2(%arg0: i32, %arg1: i32) -> (i32, i32) {
    %c0_i32 = arith.constant 0 : i32
    %c0_i32_0 = arith.constant 0 : i32
    %c0_i32_1 = arith.constant 0 : i32
    return %c0_i32, %c0_i32_0 : i32, i32
  }
  func.func @transform_3(%arg0: i32, %arg1: i32) -> (i32, i32, i32) {
    %c0_i32 = arith.constant 0 : i32
    %c0_i32_0 = arith.constant 0 : i32
    %c0_i32_1 = arith.constant 0 : i32
    return %arg0, %c0_i32, %c0_i32_0 : i32, i32, i32
  }
}

</mosaic_0001>

<llo_original>
// kernel: tpu_custom_call.1
$region0: #{tpu_custom_call.1}
  #allocation0 [shape = 'u32[]', space=smem, size = 0x4, offset = 0x4, fixed_abs, tag = 'smem constant byte address 0x4 - core index']
  #allocation1 [shape = 'u32[72,128]{1,0:T(1,128)}', space=vmem, size = 0x9000, scoped, tag = 'internal scratch']
  #allocation2 [shape = 'f32[1,1]{1,0:T(1,128)}', space=vmem, size = 0x200, scoped, tag = 'scratch operand']
  %s0 = inlined_call_operand.vmem [shape: f32[8,32], index: 0, kind: input, shape index: {}]
  %s1 = inlined_call_operand.vmem [shape: s32[8,1], index: 1, kind: input, shape index: {}]
  %s2 = inlined_call_operand.vmem [shape: f32[32,1], index: 2, kind: input, shape index: {}]
  %s3 = inlined_call_operand.vmem [shape: f32[2,1,1], index: 3, kind: output, shape index: {}]
  %s4 = sld [smem:[#allocation0]]
  $region53: #{tpu_custom_call.1} parent=0
    _
  %s6 = ssub.s32 1, %s4
  %s7 = scalar_select 0, %s6, %s4
  loop: start=0, step=1, limit=4
  $region2: #{tpu_custom_call.1} parent=0 // loop_pre_header
    _
  $region3: #{tpu_custom_call.1} parent=0 // loop_header
    %s9 = sphi 0, %s13
    %p10 = scmp.ge.s32.totalorder %s9, 4
    %s16 = sphi 0, %s28
    %s17 = sphi 0, %s24
    %s18 = sphi 0, %s16
    %s19 = sphi 0, %s17
    %s20 = sphi 0, %s18
    %s21 = sphi 0, %s19
    %s37 = sphi 0, %s39
    %s40 = sphi 0, %s37
    %s41 = sphi 0, %s40
    %s57 = sphi 0, %s41
    %s69 = sphi 0, %s71
    %s72 = sphi 0, %s69
    %s73 = sphi 0, %s72
    %s89 = sphi 0, %s73
    %s93 = sphi 0, %s93
    %s95 = sphi 0, %s93
    %s96 = sphi 0, %s95
    %s110 = sphi 0, %s96
    %s116 = sphi 0, %s118
    %s119 = sphi 0, %s116
    %s120 = sphi 0, %s119
    %s136 = sphi 0, %s120
  $region4: #{tpu_custom_call.1} parent=0 // loop_header_branch
    %12 = sbr.rel (%p10) target = $region8
  $region5: #{tpu_custom_call.1} parent=0 // loop_body
    %s14 = ssub.s32 %s9, 1
    %s15 = ssub.s32 %s9, 2
    %s22 = sadd.s32 1, %s17
    %p23 = scmp.ge.s32.totalorder %s22, 1
    %s24 = scalar_select %p23, 0, %s22
    %s25 = sadd.s32 1, %s16
    %s26 = scalar_select %p23, %s25, %s16
    %p27 = scmp.ge.s32.totalorder %s26, 2
    %s28 = scalar_select %p27, 0, %s26
    %s29 = sadd.s32 %s16, %s17
    %p30 = scmp.lt.s32.totalorder %s29, 0
    %s31 = scalar_select %p30, %s29, 0
    %s32 = sadd.s32 %s28, %s24
    %p33 = scmp.lt.s32.totalorder %s32, 0
    %s34 = scalar_select %p33, %s32, 0
    %s35 = ssub.s32 %s31, %s34
    %p36 = scmp.eq.s32.totalorder %s35, 0
    %s38 = sadd.s32 %s37, 1
    %s39 = scalar_select %p36, %s37, %s38
    %p42 = pneg %p36
    %p43 = scmp.eq.s32.totalorder %s9, 1
    %p44 = por %p42, %p43
    %p45 = scmp.ne.s32.totalorder %s37, %s40
    %p46 = scmp.eq.s32.totalorder %s9, 0
    %p47 = por %p45, %p46
    %p48 = scmp.ne.s32.totalorder %s37, %s40
    %p49 = scmp.eq.s32.totalorder %s14, 1
    %p50 = por %p48, %p49
    %p51 = scmp.ne.s32.totalorder %s40, %s41
    %p52 = scmp.eq.s32.totalorder %s14, 0
    %p53 = por %p51, %p52
    %p54 = scmp.ne.s32.totalorder %s40, %s41
    %p55 = scmp.eq.s32.totalorder %s15, 1
    %p56 = por %p54, %p55
    %p58 = scmp.ne.s32.totalorder %s41, %s57
    %p59 = scmp.eq.s32.totalorder %s15, 0
    %p60 = por %p58, %p59
    %s61 = sadd.s32 %s16, %s17
    %p62 = scmp.lt.s32.totalorder %s61, 0
    %s63 = scalar_select %p62, %s61, 0
    %s64 = sadd.s32 %s28, %s24
    %p65 = scmp.lt.s32.totalorder %s64, 0
    %s66 = scalar_select %p65, %s64, 0
    %s67 = ssub.s32 %s63, %s66
    %p68 = scmp.eq.s32.totalorder %s67, 0
    %s70 = sadd.s32 %s69, 1
    %s71 = scalar_select %p68, %s69, %s70
    %p74 = pneg %p68
    %p75 = scmp.eq.s32.totalorder %s9, 1
    %p76 = por %p74, %p75
    %p77 = scmp.ne.s32.totalorder %s69, %s72
    %p78 = scmp.eq.s32.totalorder %s9, 0
    %p79 = por %p77, %p78
    %p80 = scmp.ne.s32.totalorder %s69, %s72
    %p81 = scmp.eq.s32.totalorder %s14, 1
    %p82 = por %p80, %p81
    %p83 = scmp.ne.s32.totalorder %s72, %s73
    %p84 = scmp.eq.s32.totalorder %s14, 0
    %p85 = por %p83, %p84
    %p86 = scmp.ne.s32.totalorder %s72, %s73
    %p87 = scmp.eq.s32.totalorder %s15, 1
    %p88 = por %p86, %p87
    %p90 = scmp.ne.s32.totalorder %s73, %s89
    %p91 = scmp.eq.s32.totalorder %s15, 0
    %p92 = por %p90, %p91
    %s94 = sadd.s32 %s93, 1
    %p97 = scmp.eq.s32.totalorder %s9, 1
    %p98 = scmp.ne.s32.totalorder %s93, %s95
    %p99 = scmp.eq.s32.totalorder %s9, 0
    %p100 = por %p98, %p99
    %p101 = scmp.ne.s32.totalorder %s93, %s95
    %p102 = scmp.eq.s32.totalorder %s14, 1
    %p103 = por %p101, %p102
    %p104 = scmp.ne.s32.totalorder %s95, %s96
    %p105 = scmp.eq.s32.totalorder %s14, 0
    %p106 = por %p104, %p105
    %p107 = scmp.ne.s32.totalorder %s95, %s96
    %p108 = scmp.eq.s32.totalorder %s15, 1
    %p109 = por %p107, %p108
    %p111 = scmp.ne.s32.totalorder %s96, %s110
    %p112 = scmp.eq.s32.totalorder %s15, 0
    %p113 = por %p111, %p112
    %s114 = ssub.s32 %s16, %s28
    %p115 = scmp.eq.s32.totalorder %s114, 0
    %s117 = sadd.s32 %s116, 1
    %s118 = scalar_select %p115, %s116, %s117
    %p121 = pneg %p115
    %p122 = scmp.eq.s32.totalorder %s9, 1
    %p123 = por %p121, %p122
    %p124 = scmp.ne.s32.totalorder %s116, %s119
    %p125 = scmp.eq.s32.totalorder %s9, 0
    %p126 = por %p124, %p125
    %p127 = scmp.ne.s32.totalorder %s116, %s119
    %p128 = scmp.eq.s32.totalorder %s14, 1
    %p129 = por %p127, %p128
    %p130 = scmp.ne.s32.totalorder %s119, %s120
    %p131 = scmp.eq.s32.totalorder %s14, 0
    %p132 = por %p130, %p131
    %p133 = scmp.ne.s32.totalorder %s119, %s120
    %p134 = scmp.eq.s32.totalorder %s15, 1
    %p135 = por %p133, %p134
    %p137 = scmp.ne.s32.totalorder %s120, %s136
    %p138 = scmp.eq.s32.totalorder %s15, 0
    %p139 = por %p137, %p138
    %p140 = scmp.le.s32.totalorder 1, %s9
    %p141 = scmp.lt.s32.totalorder %s9, 3
    %p142 = pnand %p140, %p141
    %p143 = pneg %p142
    // Predicated region
    $region9: #{tpu_custom_call.1} parent=5 // pred_check
      _
    $region10: #{tpu_custom_call.1} parent=5 // pred_check_branch
      %145 = sbr.rel (%p142) target = $region12
    $region11: #{tpu_custom_call.1} parent=5 // pred_region
      %s146 = ssub.s32 %s9, 1
      // Predicated region
      $region13: #{tpu_custom_call.1} parent=11 // pred_check
        %p147 = pneg %p106
      $region14: #{tpu_custom_call.1} parent=11 // pred_check_branch
        %149 = sbr.rel (%p147) target = $region16
      $region15: #{tpu_custom_call.1} parent=11 // pred_region
        _
      $region16: #{tpu_custom_call.1} parent=11 // pred_fallthru
        _
    $region12: #{tpu_custom_call.1} parent=5 // pred_fallthru
      _
    %p150 = scmp.lt.s32.totalorder %s9, 2
    // Predicated region
    $region17: #{tpu_custom_call.1} parent=5 // pred_check
      %p151 = pneg %p150
    $region18: #{tpu_custom_call.1} parent=5 // pred_check_branch
      %153 = sbr.rel (%p151) target = $region20
    $region19: #{tpu_custom_call.1} parent=5 // pred_region
      // Predicated region
      $region21: #{tpu_custom_call.1} parent=19 // pred_check
        %p154 = pneg %p47
      $region22: #{tpu_custom_call.1} parent=19 // pred_check_branch
        %156 = sbr.rel (%p154) target = $region24
      $region23: #{tpu_custom_call.1} parent=19 // pred_region
        %s157 = sadd.s32 %s16, %s17
        %p158 = scmp.lt.s32.totalorder %s157, 0
        %s159 = scalar_select %p158, %s157, 0
        %s160 = smul.u32 4, %s159
        %s161 = ssub.s32 1, %s160
        %s162 = smul.u32 8, %s161
        %p163 = scmp.lt.s32.totalorder %s160, 0
        %s164 = scalar_select %p163, %s160, 0
        %s165 = smul.addr %s164, 8
        %s166 = scalar_lea.vmem %s0, %s165
        %s167 = sadd.s32 %s16, %s17
        %p168 = scmp.lt.s32.totalorder %s167, 0
        %s169 = scalar_select %p168, %s167, 0
        %s170 = smul.u32 4, %s169
        %s171 = ssub.s32 1, %s170
        %s172 = smul.u32 8, %s171
      $region24: #{tpu_custom_call.1} parent=19 // pred_fallthru
        _
      // Predicated region
      $region25: #{tpu_custom_call.1} parent=19 // pred_check
        %p173 = pneg %p79
      $region26: #{tpu_custom_call.1} parent=19 // pred_check_branch
        %175 = sbr.rel (%p173) target = $region28
      $region27: #{tpu_custom_call.1} parent=19 // pred_region
        %s176 = sadd.s32 %s16, %s17
        %p177 = scmp.lt.s32.totalorder %s176, 0
        %s178 = scalar_select %p177, %s176, 0
        %s179 = smul.u32 4, %s178
        %s180 = ssub.s32 1, %s179
        %s181 = smul.u32 8, %s180
        %p182 = scmp.lt.s32.totalorder %s179, 0
        %s183 = scalar_select %p182, %s179, 0
        %s184 = smul.addr %s183, 8
        %s185 = scalar_lea.vmem %s1, %s184
        %s186 = sadd.s32 %s16, %s17
        %p187 = scmp.lt.s32.totalorder %s186, 0
        %s188 = scalar_select %p187, %s186, 0
        %s189 = smul.u32 4, %s188
        %s190 = ssub.s32 1, %s189
        %s191 = smul.u32 8, %s190
      $region28: #{tpu_custom_call.1} parent=19 // pred_fallthru
        _
    $region20: #{tpu_custom_call.1} parent=5 // pred_fallthru
      _
    %p192 = scmp.le.s32.totalorder 1, %s9
    %p193 = scmp.lt.s32.totalorder %s9, 3
    %p194 = pnand %p192, %p193
    %p195 = pneg %p194
    // Predicated region
    $region29: #{tpu_custom_call.1} parent=5 // pred_check
      _
    $region30: #{tpu_custom_call.1} parent=5 // pred_check_branch
      %197 = sbr.rel (%p194) target = $region32
    $region31: #{tpu_custom_call.1} parent=5 // pred_region
      %s198 = ssub.s32 %s9, 1
      %s199 = sadd.s32 %s18, %s19
      %p200 = scmp.lt.s32.totalorder %s199, 0
      %s201 = scalar_select %p200, %s199, 0
      %s202 = smul.u32 4, %s201
      %s203 = ssub.s32 1, %s202
      %s204 = smul.u32 8, %s203
      %p205 = scmp.lt.s32.totalorder %s202, 0
      %s206 = scalar_select %p205, %s202, 0
      %s207 = smul.addr %s206, 8
      %s208 = scalar_lea.vmem %s0, %s207
      %p209 = pneg %p53
      %p210 = pneg %p50
      %s211 = sadd.s32 %s18, %s19
      %p212 = scmp.lt.s32.totalorder %s211, 0
      %s213 = scalar_select %p212, %s211, 0
      %s214 = smul.u32 4, %s213
      %s215 = ssub.s32 1, %s214
      %s216 = smul.u32 8, %s215
      %p217 = scmp.lt.s32.totalorder %s214, 0
      %s218 = scalar_select %p217, %s214, 0
      %s219 = smul.addr %s218, 8
      %s220 = scalar_lea.vmem %s1, %s219
      %p221 = pneg %p85
      %p222 = pneg %p82
      %p223 = pneg %p106
      %p224 = pneg %p103
      %p225 = pneg %p132
      %p226 = pneg %p129
      %p227 = scmp.lt.s32.totalorder %s18, 1
      %s228 = scalar_select %p227, %s18, 1
      %s229 = scalar_lea.vmem %s3, %s228
      %s230 = sadd.s32 %s18, %s19
      %p231 = scmp.lt.s32.totalorder %s230, 0
      %s232 = scalar_select %p231, %s230, 0
      %s233 = smul.u32 4, %s232
      %s234 = ssub.s32 1, %s233
      %s235 = smul.u32 8, %s234
      %p236 = scmp.lt.s32.totalorder %s233, 0
      %s237 = scalar_select %p236, %s233, 0
      %s238 = smul.addr %s237, 8
      %s239 = scalar_lea.vmem %s0, %s238
      %s240 = sadd.s32 %s18, %s19
      %p241 = scmp.lt.s32.totalorder %s240, 0
      %s242 = scalar_select %p241, %s240, 0
      %s243 = smul.u32 4, %s242
      %s244 = ssub.s32 1, %s243
      %s245 = smul.u32 8, %s244
      %s246 = sadd.s32 %s18, %s19
      %p247 = scmp.lt.s32.totalorder %s246, 0
      %s248 = scalar_select %p247, %s246, 0
      %s249 = smul.u32 4, %s248
      %s250 = ssub.s32 1, %s249
      %s251 = smul.u32 8, %s250
      %p252 = scmp.lt.s32.totalorder %s249, 0
      %s253 = scalar_select %p252, %s249, 0
      %s254 = smul.addr %s253, 8
      %s255 = scalar_lea.vmem %s1, %s254
      %s256 = sadd.s32 %s18, %s19
      %p257 = scmp.lt.s32.totalorder %s256, 0
      %s258 = scalar_select %p257, %s256, 0
      %s259 = smul.u32 4, %s258
      %s260 = ssub.s32 1, %s259
      %s261 = smul.u32 8, %s260
      %p262 = scmp.lt.s32.totalorder %s18, 1
      %s263 = scalar_select %p262, %s18, 1
      %s264 = scalar_lea.vmem %s3, %s263
      %p265 = scmp.eq.s32.totalorder %s19, 0
      // Predicated region
      $region33: #{tpu_custom_call.1} parent=31 // pred_check
        %p266 = pneg %p265
      $region34: #{tpu_custom_call.1} parent=31 // pred_check_branch
        %268 = sbr.rel (%p266) target = $region36
      $region35: #{tpu_custom_call.1} parent=31 // pred_region
        %vm269 = vcmask 0
        %270 = vst.msk [vmem:[#allocation2] sm:$0x1] %vm269, 0.0
      $region36: #{tpu_custom_call.1} parent=31 // pred_fallthru
        _
      %v271 = vld [vmem:[%s239] sm:$0xff]
      %v272 = vld [vmem:[%s239 + $0x8] sm:$0xff]
      %v273 = vld [vmem:[%s239 + $0x10] sm:$0xff]
      %v274 = vld [vmem:[%s239 + $0x18] sm:$0xff]
      %v275 = vld [vmem:[%s255] sm:$0xff]
      %v276 = vld [vmem:[%s255 + $0x8] sm:$0xff]
      %v277 = vld [vmem:[%s255 + $0x10] sm:$0xff]
      %v278 = vld [vmem:[%s255 + $0x18] sm:$0xff]
      %vm279 = vcmask 261120
      %v280 = vsel %vm279, %v271, -inf
      %281 = vmax.xlane.f32.xlu0 %v280
      %v282 = vpop.xlane.xlu0 %281
      %v283 = vsel %vm279, %v272, -inf
      %284 = vmax.xlane.f32.xlu0 %v283
      %v285 = vpop.xlane.xlu0 %284
      %v286 = vsel %vm279, %v273, -inf
      %287 = vmax.xlane.f32.xlu0 %v286
      %v288 = vpop.xlane.xlu0 %287
      %v289 = vsel %vm279, %v274, -inf
      %290 = vmax.xlane.f32.xlu0 %v289
      %v291 = vpop.xlane.xlu0 %290
      %v292 = vsub.f32 %v271, %v282
      %v293 = vsub.f32 %v272, %v285
      %v294 = vsub.f32 %v273, %v288
      %v295 = vsub.f32 %v274, %v291
      %v296 = vmul.f32 %v292, 1.442695
      %v297 = vpow.pop %v296
      %v298 = vmul.f32 %v293, 1.442695
      %v299 = vpow.pop %v298
      %v300 = vmul.f32 %v294, 1.442695
      %v301 = vpow.pop %v300
      %v302 = vmul.f32 %v295, 1.442695
      %v303 = vpow.pop %v302
      %v305 = vsel %vm279, %v297, 0
      %v308 = vsel %vm279, %v299, 0
      %v311 = vsel %vm279, %v301, 0
      %v314 = vsel %vm279, %v303, 0
      %316 = vmatpush.msra.mxu0 0.0
      %317 = vmatpush.msra.mxu0 0.0
      %318 = vmatpush.msra.mxu0 0.0
      %319 = vmatpush.msra.mxu0 0.0
      %320 = vmatpush.msra.mxu0 0.0
      %321 = vmatpush.msra.mxu0 0.0
      %322 = vmatpush.msra.mxu0 0.0
      %323 = vmatpush.msra.mxu0 0.0
      %324 = vmatpush.msra.mxu0 0.0
      %325 = vmatpush.msra.mxu0 0.0
      %326 = vmatpush.msra.mxu0 0.0
      %327 = vmatpush.msra.mxu0 0.0
      %328 = vmatpush.msra.mxu0 1.0
      %329 = vmatpush.msra.mxu0 1.0
      %330 = vmatpush.msra.mxu0 1.0
      %331 = vmatpush.msra.mxu0 1.0
      %332 = vmatmul.f32.gmra.mxu0 %v305
      %v333 = vpop.f32.mrf.mxu0
      %v334 = vadd.f32 0.0, %v333
      %335 = vmatmul.f32.gmra.mxu0 %v308
      %v336 = vpop.f32.mrf.mxu0
      %v337 = vadd.f32 0.0, %v336
      %338 = vmatmul.f32.gmra.mxu0 %v311
      %v339 = vpop.f32.mrf.mxu0
      %v340 = vadd.f32 0.0, %v339
      %341 = vmatmul.f32.gmra.mxu0 %v314
      %v342 = vpop.f32.mrf.mxu0
      %v343 = vadd.f32 0.0, %v342
      %344 = vdwg.mxu0
      %v345 = vlaneseq
      %v346 = vand.u32 %v345, 127
      %347 = vset.pattern.permute.xlu0 0
      %348 = vperm.xlu0 %347, %v275
      %v349 = vpop.permute.xlu0 %348
      %350 = vset.pattern.permute.xlu0 0
      %351 = vperm.xlu0 %350, %v276
      %v352 = vpop.permute.xlu0 %351
      %353 = vset.pattern.permute.xlu0 0
      %354 = vperm.xlu0 %353, %v277
      %v355 = vpop.permute.xlu0 %354
      %356 = vset.pattern.permute.xlu0 0
      %357 = vperm.xlu0 %356, %v278
      %v358 = vpop.permute.xlu0 %357
      %vm359 = vcmp.eq.s32.totalorder %v346, %v349
      %vm360 = vcmp.eq.s32.totalorder %v346, %v352
      %vm361 = vcmp.eq.s32.totalorder %v346, %v355
      %vm362 = vcmp.eq.s32.totalorder %v346, %v358
      %v363 = vsel %vm359, %v292, 0.0
      %v364 = vsel %vm360, %v293, 0.0
      %v365 = vsel %vm361, %v294, 0.0
      %v366 = vsel %vm362, %v295, 0.0
      %v368 = vsel %vm279, %v363, 0
      %v371 = vsel %vm279, %v364, 0
      %v374 = vsel %vm279, %v365, 0
      %v377 = vsel %vm279, %v366, 0
      %379 = vmatpush.msra.mxu0 0.0
      %380 = vmatpush.msra.mxu0 0.0
      %381 = vmatpush.msra.mxu0 0.0
      %382 = vmatpush.msra.mxu0 0.0
      %383 = vmatpush.msra.mxu0 0.0
      %384 = vmatpush.msra.mxu0 0.0
      %385 = vmatpush.msra.mxu0 0.0
      %386 = vmatpush.msra.mxu0 0.0
      %387 = vmatpush.msra.mxu0 0.0
      %388 = vmatpush.msra.mxu0 0.0
      %389 = vmatpush.msra.mxu0 0.0
      %390 = vmatpush.msra.mxu0 0.0
      %391 = vmatpush.msra.mxu0 1.0
      %392 = vmatpush.msra.mxu0 1.0
      %393 = vmatpush.msra.mxu0 1.0
      %394 = vmatpush.msra.mxu0 1.0
      %395 = vmatmul.f32.gmra.mxu0 %v368
      %v396 = vpop.f32.mrf.mxu0
      %v397 = vadd.f32 0.0, %v396
      %398 = vmatmul.f32.gmra.mxu0 %v371
      %v399 = vpop.f32.mrf.mxu0
      %v400 = vadd.f32 0.0, %v399
      %401 = vmatmul.f32.gmra.mxu0 %v374
      %v402 = vpop.f32.mrf.mxu0
      %v403 = vadd.f32 0.0, %v402
      %404 = vmatmul.f32.gmra.mxu0 %v377
      %v405 = vpop.f32.mrf.mxu0
      %v406 = vadd.f32 0.0, %v405
      %407 = vdwg.mxu0
      %v408 = vlog2.pop %v334
      %v409 = vmul.f32 %v408, 0.6931472
      %v410 = vlog2.pop %v337
      %v411 = vmul.f32 %v410, 0.6931472
      %v412 = vlog2.pop %v340
      %v413 = vmul.f32 %v412, 0.6931472
      %v414 = vlog2.pop %v343
      %v415 = vmul.f32 %v414, 0.6931472
      %v416 = vsub.f32 %v397, %v409
      %v417 = vsub.f32 %v400, %v411
      %v418 = vsub.f32 %v403, %v413
      %v419 = vsub.f32 %v406, %v415
      %v420 = vmul.f32 %v416, 1.442695
      %v421 = vpow.pop %v420
      %v422 = vmul.f32 %v417, 1.442695
      %v423 = vpow.pop %v422
      %v424 = vmul.f32 %v418, 1.442695
      %v425 = vpow.pop %v424
      %v426 = vmul.f32 %v419, 1.442695
      %v427 = vpow.pop %v426
      %v428 = vsub.f32 1.0, %v421
      %v429 = vsub.f32 1.0, %v423
      %v430 = vsub.f32 1.0, %v425
      %v431 = vsub.f32 1.0, %v427
      %v432 = vmax.f32 %v428, 0.0
      %v433 = vmax.f32 %v429, 0.0
      %v434 = vmax.f32 %v430, 0.0
      %v435 = vmax.f32 %v431, 0.0
      %v436 = vmul.f32 %v432, %v432
      %v437 = vmul.f32 %v433, %v433
      %v438 = vmul.f32 %v434, %v434
      %v439 = vmul.f32 %v435, %v435
      %v440 = vmul.f32 %v436, %v416
      %v441 = vmul.f32 %v437, %v417
      %v442 = vmul.f32 %v438, %v418
      %v443 = vmul.f32 %v439, %v419
      %v444 = vsub.f32 0.0, %v440
      %v445 = vsub.f32 0.0, %v441
      %v446 = vsub.f32 0.0, %v442
      %v447 = vsub.f32 0.0, %v443
      %s448 = sadd.s32 %s18, %s19
      %s449 = smul.u32 %s448, 32
      %v450 = vlaneseq
      %v451 = vshrl.u32 %v450, 7
      %v452 = vadd.s32 %v451, 8
      %v453 = vadd.s32 %v451, 16
      %v454 = vadd.s32 %v451, 24
      %v455 = vstv %s449
      %v456 = vadd.s32 %v455, %v451
      %v457 = vadd.s32 %v455, %v452
      %v458 = vadd.s32 %v455, %v453
      %v459 = vadd.s32 %v455, %v454
      %vm460 = vcmp.lt.s32.totalorder %v456, 8
      %vm461 = vcmp.lt.s32.totalorder %v457, 8
      %vm462 = vcmp.lt.s32.totalorder %v458, 8
      %vm463 = vcmp.lt.s32.totalorder %v459, 8
      %v464 = vsel %vm460, %v444, 0.0
      %v465 = vsel %vm461, %v445, 0.0
      %v466 = vsel %vm462, %v446, 0.0
      %v467 = vsel %vm463, %v447, 0.0
      %v468 = vld [vmem:[#allocation2] sm:$0x1]
      %vm469 = vcmask 7168
      %v470 = vsel %vm469, %v464, 0.0
      %v471 = vsel %vm469, %v465, 0.0
      %v472 = vadd.f32 %v470, %v471
      %v473 = vsel %vm469, %v466, 0.0
      %v474 = vadd.f32 %v472, %v473
      %v475 = vsel %vm469, %v467, 0.0
      %v476 = vadd.f32 %v474, %v475
      %477 = vadd.xlane.f32.xlu0 %v476
      %v478 = vpop.xlane.xlu0 %477
      %v479 = vrot.slane %v478, 4
      %v480 = vadd.f32 %v478, %v479
      %v481 = vrot.slane %v480, 2
      %v482 = vadd.f32 %v480, %v481
      %v483 = vrot.slane %v482, 1
      %v484 = vadd.f32 %v482, %v483
      %s485 = vtos %v484
      %v486 = vstv %s485
      %v487 = vadd.f32 %v468, %v486
      %vm488 = vcmask 0
      %489 = vst.msk [vmem:[#allocation2] sm:$0x1] %vm488, %v487
      // Predicated region
      $region37: #{tpu_custom_call.1} parent=31 // pred_check
        %p490 = pneg %p265
      $region38: #{tpu_custom_call.1} parent=31 // pred_check_branch
        %492 = sbr.rel (%p490) target = $region40
      $region39: #{tpu_custom_call.1} parent=31 // pred_region
        %v493 = vld [vmem:[#allocation2] sm:$0x1]
        %494 = vst.msk [vmem:[%s264] sm:$0x1] %vm488, %v493
      $region40: #{tpu_custom_call.1} parent=31 // pred_fallthru
        _
      %p495 = scmp.lt.s32.totalorder %s18, 1
      %s496 = scalar_select %p495, %s18, 1
      %s497 = scalar_lea.vmem %s3, %s496
      // Predicated region
      $region41: #{tpu_custom_call.1} parent=31 // pred_check
        %p498 = pneg %p129
      $region42: #{tpu_custom_call.1} parent=31 // pred_check_branch
        %500 = sbr.rel (%p498) target = $region44
      $region43: #{tpu_custom_call.1} parent=31 // pred_region
        _
      $region44: #{tpu_custom_call.1} parent=31 // pred_fallthru
        _
    $region32: #{tpu_custom_call.1} parent=5 // pred_fallthru
      _
    %p501 = scmp.le.s32.totalorder 2, %s9
    // Predicated region
    $region45: #{tpu_custom_call.1} parent=5 // pred_check
      %p502 = pneg %p501
    $region46: #{tpu_custom_call.1} parent=5 // pred_check_branch
      %504 = sbr.rel (%p502) target = $region48
    $region47: #{tpu_custom_call.1} parent=5 // pred_region
      %s505 = ssub.s32 %s9, 2
      // Predicated region
      $region49: #{tpu_custom_call.1} parent=47 // pred_check
        %p506 = pneg %p135
      $region50: #{tpu_custom_call.1} parent=47 // pred_check_branch
        %508 = sbr.rel (%p506) target = $region52
      $region51: #{tpu_custom_call.1} parent=47 // pred_region
        %p509 = scmp.lt.s32.totalorder %s20, 1
        %s510 = scalar_select %p509, %s20, 1
        %s511 = scalar_lea.vmem %s3, %s510
      $region52: #{tpu_custom_call.1} parent=47 // pred_fallthru
        _
    $region48: #{tpu_custom_call.1} parent=5 // pred_fallthru
      _
  $region6: #{tpu_custom_call.1} parent=0 // loop_footer
    %s13 = sadd.s32 1, %s9
  $region7: #{tpu_custom_call.1} parent=0 // loop_footer_branch
    %8 = sbr.rel target = $region3
  $region8: #{tpu_custom_call.1} parent=0 // loop_exit
    _

</llo_original>
